<compile_context>
chip_gen: v5e
topology: v5e:2x2
jax: 0.10.0
libtpu: 0.0.40
codegen_flags: <defaults>
</compile_context>

<pallas_src>
import functools

import jax
import jax.numpy as jnp
from jax import lax
from jax.experimental import pallas as pl
from jax.experimental.pallas import tpu as pltpu


_MSE_KINDS = ("MSE", "mse", "Frob", "F")
_L1_KINDS = ("L1", "l1")
_L2_KINDS = ("LAD", "lad", "L21", "l21", "L2", "l2")


def _rowwise_norm_sum(d, kind):
    """sum_b norm(d_b, p, dim=1) [**2 for MSE]. Zero rows/lanes contribute 0."""
    if kind in _MSE_KINDS:
        return jnp.sum(d * d)
    elif kind in _L1_KINDS:
        return jnp.sum(jnp.abs(d))
    elif kind in _L2_KINDS:
        return jnp.sum(jnp.sqrt(jnp.sum(d * d, axis=1, keepdims=True)))
    else:
        raise ValueError("Norm type error!")


def _leloss_kernel(x_ref, dec_ref, enc_ref, lat_ref, a_ref, out_ref, *,
                   lambda1, lambda2, intrinsic_size, batch_size,
                   if_robust, all_alt, norm_type, loss_norm_type):
    step = pl.program_id(0)

    # _reconstruction_error: streamed (TB, D_pad) batch tile -> block partial sum.
    d = x_ref[...].astype(jnp.float32) - dec_ref[...].astype(jnp.float32)
    total = _rowwise_norm_sum(d, loss_norm_type)

    if if_robust and not all_alt:
        enc = enc_ref[...].astype(jnp.float32)                 # (TB, D_enc)
        lat = lat_ref[...].astype(jnp.float32)                 # (TB, K)
        A = a_ref[...].astype(jnp.float32)                     # (D_enc, K) resident

        # z = latent @ rsrA.T (contract K) -> (TB, D_enc).  _pca_error and
        # _local_error share the same residual: compute once, weight by l1+0.1.
        z = lax.dot_general(lat, A, (((1,), (1,)), ((), ())),
                            preferred_element_type=jnp.float32)
        total = total + (lambda1 + 0.1) * _rowwise_norm_sum(enc - z, norm_type)

    # Both batched terms are means over the true batch size.
    total = total * (1.0 / float(batch_size))

    if if_robust and not all_alt:
        # _proj_error is batch-independent: fold it into block 0's partial only.
        # mean((A.T@A - I)^2) = (sum(g^2) - 2*trace(g) + K)/K^2, trace(g)=sum(A*A).
        g = lax.dot_general(A, A, (((0,), (0,)), ((), ())),
                            preferred_element_type=jnp.float32)   # (K, K)
        k = float(intrinsic_size)
        proj = (jnp.sum(g * g) - 2.0 * jnp.sum(A * A) + k) / (k * k)
        total = total + jnp.where(step == 0, lambda2 * proj, 0.0)

    # Write the block partial into lane (0, 0) of this block's own (8, 128)
    # output tile (everything else zero); the wrapper sums the whole output.
    r = lax.broadcasted_iota(jnp.int32, (8, 128), 0)
    c = lax.broadcasted_iota(jnp.int32, (8, 128), 1)
    out_ref[...] = jnp.where((r == 0) & (c == 0), total, 0.0)[None, :, :]


def _round_up(n, m):
    return ((n + m - 1) // m) * m


def _cdiv(a, b):
    return (a + b - 1) // b


def leloss_pallas(x, encoded, latent, decoded, rsrA, *,
                  lambda1, lambda2, intrinsic_size,
                  if_robust=True, all_alt=False,
                  norm_type="MSE", loss_norm_type="MSE",
                  tile_rows=None):
    # Glue: NCHW -> (B, C*H*W) row-major flatten (same as torch .view(B, -1)).
    # No dtype cast here: bf16 inputs stream at half the HBM bytes.
    b = x.shape[0]
    x_flat = x.reshape(b, -1)
    dec_flat = decoded.reshape(b, -1)
    d = x_flat.shape[1]

    # Lane-dense feature dim: pad D to a multiple of 128 (identical zero padding
    # on x and decoded -> zero contribution to every supported norm).
    d_pad = _round_up(d, 128)
    if d_pad != d:
        x_flat = jnp.pad(x_flat, ((0, 0), (0, d_pad - d)))
        dec_flat = jnp.pad(dec_flat, ((0, 0), (0, d_pad - d)))

    # Batch tile: ~4 MiB per streamed input tile (roofline knee), but keep at
    # least ~8 grid steps when the batch allows (pipeline depth + megacore
    # split on v7x) and never drop below ~1 MiB tiles or 8 rows.
    if tile_rows is None:
        itemsize = jnp.dtype(x_flat.dtype).itemsize
        row_bytes = d_pad * itemsize
        by_vmem = max(1, (4 * 1024 * 1024) // row_bytes)
        by_grid = _cdiv(b, 8)
        by_floor = _cdiv(1 * 1024 * 1024, row_bytes)
        tile_rows = max(8, min(by_vmem, max(by_grid, by_floor, 8)))
    tile_rows = _round_up(int(tile_rows), 8)
    tile_rows = min(tile_rows, _round_up(b, 8))

    # Zero-pad the batch to a multiple of the tile; padded rows (x==dec==0,
    # enc==lat==0) contribute 0, and the means divide by the true B.
    b_pad = _round_up(b, tile_rows)
    pad_rows = b_pad - b
    if pad_rows:
        x_flat = jnp.pad(x_flat, ((0, pad_rows), (0, 0)))
        dec_flat = jnp.pad(dec_flat, ((0, pad_rows), (0, 0)))
        enc_p = jnp.pad(encoded, ((0, pad_rows), (0, 0)))
        lat_p = jnp.pad(latent, ((0, pad_rows), (0, 0)))
    else:
        enc_p, lat_p = encoded, latent
    num_blocks = b_pad // tile_rows
    d_enc = enc_p.shape[1]
    k_lat = lat_p.shape[1]

    # Scoped-VMEM budget: double-buffered streams + resident rsrA + output
    # tiles + f32 intermediates + slack.  Floor at the v6e/v7x default 32 MiB
    # (so v5e's 16 MiB default is not the limiter), cap under v7x's 64 MiB.
    def _isz(a):
        return jnp.dtype(a.dtype).itemsize
    stream = 2 * (2 * tile_rows * d_pad * _isz(x_flat)
                  + tile_rows * d_enc * _isz(enc_p)
                  + tile_rows * k_lat * _isz(lat_p))
    resident = 2 * rsrA.shape[0] * rsrA.shape[1] * _isz(rsrA) + 2 * 8 * 128 * 4
    interm = 3 * tile_rows * d_pad * 4 + 2 * tile_rows * d_enc * 4
    vmem_limit = int(min(max(stream + resident + interm + (4 << 20), 32 << 20),
                         56 << 20))

    kernel = functools.partial(
        _leloss_kernel,
        lambda1=float(lambda1), lambda2=float(lambda2),
        intrinsic_size=int(intrinsic_size), batch_size=int(b),
        if_robust=bool(if_robust), all_alt=bool(all_alt),
        norm_type=norm_type, loss_norm_type=loss_norm_type)

    out = pl.pallas_call(
        kernel,
        out_shape=jax.ShapeDtypeStruct((num_blocks, 8, 128), jnp.float32),
        grid_spec=pltpu.PrefetchScalarGridSpec(
            num_scalar_prefetch=0,
            grid=(num_blocks,),
            in_specs=[
                pl.BlockSpec((tile_rows, d_pad), lambda i: (i, 0)),
                pl.BlockSpec((tile_rows, d_pad), lambda i: (i, 0)),
                pl.BlockSpec((tile_rows, d_enc), lambda i: (i, 0)),
                pl.BlockSpec((tile_rows, k_lat), lambda i: (i, 0)),
                # rsrA: same block every step -> VMEM-resident, no re-DMA.
                pl.BlockSpec(rsrA.shape, lambda i: (0, 0)),
            ],
            out_specs=pl.BlockSpec((1, 8, 128), lambda i: (i, 0, 0)),
        ),
        compiler_params=pltpu.CompilerParams(
            # Fully independent per-block partials -> "parallel": sharded across
            # both TensorCores on v7x; neutral on single-TC v5e/v6e.
            dimension_semantics=("parallel",),
            vmem_limit_bytes=vmem_limit),
    )(x_flat, dec_flat, enc_p, lat_p, rsrA)

    # Tiny wrapper-side reduction over the per-block partials.
    return jnp.sum(out)


def leloss_ref(x, encoded, latent, decoded, rsrA, *,
               lambda1, lambda2, intrinsic_size, if_robust=True, all_alt=False):
    """Pure-JAX reference mirroring the PyTorch module (MSE norms)."""
    b = x.shape[0]
    xf = x.reshape(b, -1).astype(jnp.float32)
    df = decoded.reshape(b, -1).astype(jnp.float32)
    loss = jnp.mean(jnp.sum((xf - df) ** 2, axis=1))
    if if_robust and not all_alt:
        enc = encoded.astype(jnp.float32)
        lat = latent.astype(jnp.float32)
        A = rsrA.astype(jnp.float32)
        z = lat @ A.T
        pca = jnp.mean(jnp.sum((enc - z) ** 2, axis=1))
        g = A.T @ A - jnp.eye(intrinsic_size, dtype=jnp.float32)
        proj = jnp.mean(g ** 2)
        loss = loss + lambda1 * pca + lambda2 * proj + 0.1 * pca
    return loss


if __name__ == "__main__":
    # Module hyper-parameters (deterministic, in-script).
    LAMBDA1, LAMBDA2, LAMBDA3 = 0.1, 0.1, 0.1   # lambda3 unused in forward
    INTRINSIC = 8

    def _check(tag, b, c, h, w, d_enc, tile_rows, dtype=jnp.float32,
               if_robust=True, tol=1e-3):
        key = jax.random.fold_in(jax.random.PRNGKey(0), tag)
        k0, k1, k2, k3 = jax.random.split(key, 4)
        x = jax.random.normal(k0, (b, c, h, w), jnp.float32)
        decoded = x + 0.05 * jax.random.normal(k1, (b, c, h, w), jnp.float32)
        encoded = jax.random.normal(k2, (b, d_enc), jnp.float32)
        rsrA = jax.random.normal(k3, (d_enc, INTRINSIC), jnp.float32) / jnp.sqrt(d_enc)
        latent = encoded @ rsrA                                # (b, INTRINSIC)

        x = x.astype(dtype)
        decoded = decoded.astype(dtype)
        encoded = encoded.astype(dtype)
        latent = latent.astype(dtype)
        rsrA_c = rsrA.astype(dtype)

        loss = leloss_pallas(x, encoded, latent, decoded, rsrA_c,
                             lambda1=LAMBDA1, lambda2=LAMBDA2,
                             intrinsic_size=INTRINSIC,
                             if_robust=if_robust, tile_rows=tile_rows)
        jax.block_until_ready(loss)

        ref = leloss_ref(x, encoded, latent, decoded, rsrA_c,
                         lambda1=LAMBDA1, lambda2=LAMBDA2,
                         intrinsic_size=INTRINSIC, if_robust=if_robust)
        assert abs(float(loss) - float(ref)) <= tol * max(1.0, abs(float(ref))), (
            (b, c, h, w, str(dtype)), float(loss), float(ref))

    # Multi-block "parallel" path: B=32, TB=8 -> 4 grid steps, D=1024 (lane-dense).
    _check(0, 32, 4, 16, 16, 32, tile_rows=8)
    # Ragged batch (13 -> padded 16) and non-128-multiple D (300 -> padded 384).
    _check(1, 13, 3, 10, 10, 32, tile_rows=8)
    # Automatic tile sizing (single grid step).
    _check(2, 8, 4, 16, 16, 32, tile_rows=None)
    # bf16 streaming path (half HBM bytes), 2 grid steps.
    _check(3, 16, 4, 16, 16, 32, tile_rows=8, dtype=jnp.bfloat16, tol=5e-3)
    # Non-robust path: reconstruction error only.
    _check(4, 16, 4, 16, 16, 32, tile_rows=8, if_robust=False)

    print("KERNEL_OK")
</pallas_src>

<mosaic_0001>
module attributes {stable_mosaic.version = 11 : i64} {
  func.func @_leloss_kernel(%arg0: i32, %arg1: memref<8x1024xf32, #tpu.memory_space<vmem>>, %arg2: memref<8x1024xf32, #tpu.memory_space<vmem>>, %arg3: memref<8x32xf32, #tpu.memory_space<vmem>>, %arg4: memref<8x8xf32, #tpu.memory_space<vmem>>, %arg5: memref<32x8xf32, #tpu.memory_space<vmem>>, %arg6: memref<1x8x128xf32, #tpu.memory_space<vmem>>) attributes {dimension_semantics = [#tpu.dimension_semantics<parallel>], iteration_bounds = array<i64: 4>, scalar_prefetch = 0 : i64, scratch_operands = 0 : i64, tpu.core_type = #tpu.core_type<tc>, window_params = [{transform_indices = @transform_0, window_bounds = array<i64: 8, 1024>}, {transform_indices = @transform_1, window_bounds = array<i64: 8, 1024>}, {transform_indices = @transform_2, window_bounds = array<i64: 8, 32>}, {transform_indices = @transform_3, window_bounds = array<i64: 8, 8>}, {pipeline_mode = #tpu.pipeline_mode<synchronous>, transform_indices = @transform_4, window_bounds = array<i64: 32, 8>}, {transform_indices = @transform_5, window_bounds = array<i64: 1, 8, 128>}]} {
    %c0 = arith.constant 0 : index
    %c0_0 = arith.constant 0 : index
    %0 = vector.load %arg1[%c0, %c0_0] : memref<8x1024xf32, #tpu.memory_space<vmem>>, vector<8x1024xf32>
    %c0_1 = arith.constant 0 : index
    %c0_2 = arith.constant 0 : index
    %1 = vector.load %arg2[%c0_1, %c0_2] : memref<8x1024xf32, #tpu.memory_space<vmem>>, vector<8x1024xf32>
    %2 = arith.subf %0, %1 : vector<8x1024xf32>
    %3 = arith.mulf %2, %2 : vector<8x1024xf32>
    %4 = vector.shape_cast %3 : vector<8x1024xf32> to vector<1x8x1024xf32>
    %cst = arith.constant dense<0.000000e+00> : vector<1xf32>
    %5 = vector.multi_reduction <add>, %4, %cst [1, 2] : vector<1x8x1024xf32> to vector<1xf32>
    %6 = vector.shape_cast %5 : vector<1xf32> to vector<1x1x1xf32>
    %7 = vector.extract %6[0, 0, 0] : f32 from vector<1x1x1xf32>
    %c0_3 = arith.constant 0 : index
    %c0_4 = arith.constant 0 : index
    %8 = vector.load %arg3[%c0_3, %c0_4] : memref<8x32xf32, #tpu.memory_space<vmem>>, vector<8x32xf32>
    %c0_5 = arith.constant 0 : index
    %c0_6 = arith.constant 0 : index
    %9 = vector.load %arg4[%c0_5, %c0_6] : memref<8x8xf32, #tpu.memory_space<vmem>>, vector<8x8xf32>
    %c0_7 = arith.constant 0 : index
    %c0_8 = arith.constant 0 : index
    %10 = vector.load %arg5[%c0_7, %c0_8] : memref<32x8xf32, #tpu.memory_space<vmem>>, vector<32x8xf32>
    %cst_9 = arith.constant dense<0.000000e+00> : vector<8x32xf32>
    %11 = tpu.matmul %9, %10, %cst_9 {dimension_numbers = #tpu.dot_dimension_numbers<[1], [1], [0], [0], [0, 0, 1, 0], [], []>} : vector<8x8xf32>, vector<32x8xf32>, vector<8x32xf32> -> vector<8x32xf32>
    %12 = arith.subf %8, %11 : vector<8x32xf32>
    %13 = arith.mulf %12, %12 : vector<8x32xf32>
    %14 = vector.shape_cast %13 : vector<8x32xf32> to vector<1x8x32xf32>
    %cst_10 = arith.constant dense<0.000000e+00> : vector<1xf32>
    %15 = vector.multi_reduction <add>, %14, %cst_10 [1, 2] : vector<1x8x32xf32> to vector<1xf32>
    %16 = vector.shape_cast %15 : vector<1xf32> to vector<1x1x1xf32>
    %17 = vector.extract %16[0, 0, 0] : f32 from vector<1x1x1xf32>
    %cst_11 = arith.constant 2.000000e-01 : f32
    %18 = arith.mulf %cst_11, %17 : f32
    %19 = arith.addf %7, %18 : f32
    %cst_12 = arith.constant 3.125000e-02 : f32
    %20 = arith.mulf %19, %cst_12 : f32
    %cst_13 = arith.constant dense<0.000000e+00> : vector<8x8xf32>
    %21 = tpu.matmul %10, %10, %cst_13 {dimension_numbers = #tpu.dot_dimension_numbers<[0], [0], [1], [1], [0, 1, 1, 1], [], []>} : vector<32x8xf32>, vector<32x8xf32>, vector<8x8xf32> -> vector<8x8xf32>
    %22 = arith.mulf %21, %21 : vector<8x8xf32>
    %23 = vector.shape_cast %22 : vector<8x8xf32> to vector<1x8x8xf32>
    %cst_14 = arith.constant dense<0.000000e+00> : vector<1xf32>
    %24 = vector.multi_reduction <add>, %23, %cst_14 [1, 2] : vector<1x8x8xf32> to vector<1xf32>
    %25 = vector.shape_cast %24 : vector<1xf32> to vector<1x1x1xf32>
    %26 = vector.extract %25[0, 0, 0] : f32 from vector<1x1x1xf32>
    %27 = arith.mulf %10, %10 : vector<32x8xf32>
    %28 = vector.shape_cast %27 : vector<32x8xf32> to vector<1x32x8xf32>
    %cst_15 = arith.constant dense<0.000000e+00> : vector<1xf32>
    %29 = vector.multi_reduction <add>, %28, %cst_15 [1, 2] : vector<1x32x8xf32> to vector<1xf32>
    %30 = vector.shape_cast %29 : vector<1xf32> to vector<1x1x1xf32>
    %31 = vector.extract %30[0, 0, 0] : f32 from vector<1x1x1xf32>
    %cst_16 = arith.constant 2.000000e+00 : f32
    %32 = arith.mulf %cst_16, %31 : f32
    %33 = arith.subf %26, %32 : f32
    %cst_17 = arith.constant 8.000000e+00 : f32
    %34 = arith.addf %33, %cst_17 : f32
    %cst_18 = arith.constant 6.400000e+01 : f32
    %35 = arith.divf %34, %cst_18 : f32
    %c0_i32 = arith.constant 0 : i32
    %36 = arith.cmpi eq, %arg0, %c0_i32 : i32
    %cst_19 = arith.constant 1.000000e-01 : f32
    %37 = arith.mulf %cst_19, %35 : f32
    %cst_20 = arith.constant 0.000000e+00 : f32
    %38 = arith.select %36, %37, %cst_20 : f32
    %39 = arith.addf %20, %38 : f32
    %40 = tpu.iota {dimensions = array<i32: 0>} : vector<8x128xi32>
    %41 = tpu.iota {dimensions = array<i32: 1>} : vector<8x128xi32>
    %c0_i32_21 = arith.constant 0 : i32
    %42 = vector.broadcast %c0_i32_21 : i32 to vector<8x128xi32>
    %43 = arith.cmpi eq, %40, %42 : vector<8x128xi32>
    %c0_i32_22 = arith.constant 0 : i32
    %44 = vector.broadcast %c0_i32_22 : i32 to vector<8x128xi32>
    %45 = arith.cmpi eq, %41, %44 : vector<8x128xi32>
    %46 = arith.andi %43, %45 : vector<8x128xi1>
    %cst_23 = arith.constant 0.000000e+00 : f32
    %47 = vector.broadcast %39 : f32 to vector<8x128xf32>
    %48 = vector.broadcast %cst_23 : f32 to vector<8x128xf32>
    %49 = arith.select %46, %47, %48 : vector<8x128xi1>, vector<8x128xf32>
    %50 = vector.shape_cast %49 : vector<8x128xf32> to vector<1x8x128xf32>
    %c0_24 = arith.constant 0 : index
    %c0_25 = arith.constant 0 : index
    %c0_26 = arith.constant 0 : index
    %51 = vector.load %arg6[%c0_24, %c0_25, %c0_26] : memref<1x8x128xf32, #tpu.memory_space<vmem>>, vector<1x8x128xf32>
    tpu.vector_store %arg6[%c0_24, %c0_25, %c0_26], %50 {strides = array<i32>} : memref<1x8x128xf32, #tpu.memory_space<vmem>>, vector<1x8x128xf32>,
    return
  }
  func.func @transform_0(%arg0: i32) -> (i32, i32) {
    %c0_i32 = arith.constant 0 : i32
    %c0_i32_0 = arith.constant 0 : i32
    return %arg0, %c0_i32 : i32, i32
  }
  func.func @transform_1(%arg0: i32) -> (i32, i32) {
    %c0_i32 = arith.constant 0 : i32
    %c0_i32_0 = arith.constant 0 : i32
    return %arg0, %c0_i32 : i32, i32
  }
  func.func @transform_2(%arg0: i32) -> (i32, i32) {
    %c0_i32 = arith.constant 0 : i32
    %c0_i32_0 = arith.constant 0 : i32
    return %arg0, %c0_i32 : i32, i32
  }
  func.func @transform_3(%arg0: i32) -> (i32, i32) {
    %c0_i32 = arith.constant 0 : i32
    %c0_i32_0 = arith.constant 0 : i32
    return %arg0, %c0_i32 : i32, i32
  }
  func.func @transform_4(%arg0: i32) -> (i32, i32) {
    %c0_i32 = arith.constant 0 : i32
    %c0_i32_0 = arith.constant 0 : i32
    %c0_i32_1 = arith.constant 0 : i32
    return %c0_i32, %c0_i32_0 : i32, i32
  }
  func.func @transform_5(%arg0: i32) -> (i32, i32, i32) {
    %c0_i32 = arith.constant 0 : i32
    %c0_i32_0 = arith.constant 0 : i32
    %c0_i32_1 = arith.constant 0 : i32
    return %arg0, %c0_i32, %c0_i32_0 : i32, i32, i32
  }
}

</mosaic_0001>

<llo_original>
// kernel: tpu_custom_call.1
$region0: #{tpu_custom_call.1}
  #allocation0 [shape = 'u32[]', space=smem, size = 0x4, offset = 0x4, fixed_abs, tag = 'smem constant byte address 0x4 - core index']
  #allocation1 [shape = 'u32[72,128]{1,0:T(1,128)}', space=vmem, size = 0x9000, scoped, tag = 'internal scratch']
  %s0 = inlined_call_operand.hbm [shape: f32[32,1024], index: 0, kind: input, shape index: {}]
  %s1 = inlined_call_operand.hbm [shape: f32[32,1024], index: 1, kind: input, shape index: {}]
  %s2 = inlined_call_operand.vmem [shape: f32[32,32], index: 2, kind: input, shape index: {}]
  %s3 = inlined_call_operand.vmem [shape: f32[32,8], index: 3, kind: input, shape index: {}]
  %s4 = inlined_call_operand.vmem [shape: f32[32,8], index: 4, kind: input, shape index: {}]
  %s5 = inlined_call_operand.hbm [shape: f32[4,8,128], index: 5, kind: output, shape index: {}]
  %s6 = sld [smem:[#allocation0]]
  $region61: #{tpu_custom_call.1} parent=0
    _
  %s8 = ssub.s32 1, %s6
  %s9 = scalar_select 0, %s8, %s6
  $region1: #{tpu_custom_call.1} parent=0
    #allocation2 [shape = 'u8[65536]{0}', space=vmem, size = 0x10000, scoped, tag = 'input window, operand 0']
    #allocation3 [shape = 's32[2]{0}', space=sflag, size = 0x8, scoped, tag = 'scoped memory for tpu_custom_call.1']
    #allocation4 [shape = 's32[2]{0}', space=sflag, size = 0x8, scoped, tag = 'scoped memory for tpu_custom_call.1']
    #allocation5 [shape = 'u8[65536]{0}', space=vmem, size = 0x10000, scoped, tag = 'input window, operand 1']
    #allocation6 [shape = 's32[2]{0}', space=sflag, size = 0x8, scoped, tag = 'scoped memory for tpu_custom_call.1']
    #allocation7 [shape = 'u8[8192]{0}', space=vmem, size = 0x2000, scoped, tag = 'output window, operand 0']
    %10 = vsyncpa [#allocation3], 0
    %s11 = scalar_lea.sflag [#allocation3], 1
    %12 = vsyncpa %s11, 0
    %13 = vsyncpa [#allocation6], 0
    %s14 = scalar_lea.sflag [#allocation6], 1
    %15 = vsyncpa %s14, 0
    %16 = vsyncpa [#allocation4], 0
    %s17 = scalar_lea.sflag [#allocation4], 1
    %18 = vsyncpa %s17, 0
    loop: start=0, step=1, limit=6
    $region2: #{tpu_custom_call.1} parent=1 // loop_pre_header
      _
    $region3: #{tpu_custom_call.1} parent=1 // loop_header
      %s20 = sphi 0, %s24
      %p21 = scmp.ge.s32.totalorder %s20, 6
      %s30 = sphi 0, %s32
      %s33 = sphi 0, %s30
      %s34 = sphi 0, %s33
      %s50 = sphi 0, %s34
      %s56 = sphi 0, %s58
      %s59 = sphi 0, %s56
      %s60 = sphi 0, %s59
      %s76 = sphi 0, %s60
      %s82 = sphi 0, %s84
      %s85 = sphi 0, %s82
      %s86 = sphi 0, %s85
      %s102 = sphi 0, %s86
      %s108 = sphi 0, %s110
      %s111 = sphi 0, %s108
      %s112 = sphi 0, %s111
      %s128 = sphi 0, %s112
      %s132 = sphi 0, %s132
      %s134 = sphi 0, %s132
      %s135 = sphi 0, %s134
      %s149 = sphi 0, %s135
      %s155 = sphi 0, %s157
      %s158 = sphi 0, %s155
      %s159 = sphi 0, %s158
      %s175 = sphi 0, %s159
    $region4: #{tpu_custom_call.1} parent=1 // loop_header_branch
      %23 = sbr.rel (%p21) target = $region8
    $region5: #{tpu_custom_call.1} parent=1 // loop_body
      %s25 = ssub.s32 %s20, 1
      %s26 = ssub.s32 %s20, 2
      %s27 = sadd.s32 %s20, 1
      %s28 = ssub.s32 %s20, %s27
      %p29 = scmp.eq.s32.totalorder %s28, 0
      %s31 = sadd.s32 %s30, 1
      %s32 = scalar_select %p29, %s30, %s31
      %p35 = pneg %p29
      %p36 = scmp.eq.s32.totalorder %s20, 3
      %p37 = por %p35, %p36
      %p38 = scmp.ne.s32.totalorder %s30, %s33
      %p39 = scmp.eq.s32.totalorder %s20, 0
      %p40 = por %p38, %p39
      %p41 = scmp.ne.s32.totalorder %s30, %s33
      %p42 = scmp.eq.s32.totalorder %s25, 3
      %p43 = por %p41, %p42
      %p44 = scmp.ne.s32.totalorder %s33, %s34
      %p45 = scmp.eq.s32.totalorder %s25, 0
      %p46 = por %p44, %p45
      %p47 = scmp.ne.s32.totalorder %s33, %s34
      %p48 = scmp.eq.s32.totalorder %s26, 3
      %p49 = por %p47, %p48
      %p51 = scmp.ne.s32.totalorder %s34, %s50
      %p52 = scmp.eq.s32.totalorder %s26, 0
      %p53 = por %p51, %p52
      %s54 = ssub.s32 %s20, %s27
      %p55 = scmp.eq.s32.totalorder %s54, 0
      %s57 = sadd.s32 %s56, 1
      %s58 = scalar_select %p55, %s56, %s57
      %p61 = pneg %p55
      %p62 = scmp.eq.s32.totalorder %s20, 3
      %p63 = por %p61, %p62
      %p64 = scmp.ne.s32.totalorder %s56, %s59
      %p65 = scmp.eq.s32.totalorder %s20, 0
      %p66 = por %p64, %p65
      %p67 = scmp.ne.s32.totalorder %s56, %s59
      %p68 = scmp.eq.s32.totalorder %s25, 3
      %p69 = por %p67, %p68
      %p70 = scmp.ne.s32.totalorder %s59, %s60
      %p71 = scmp.eq.s32.totalorder %s25, 0
      %p72 = por %p70, %p71
      %p73 = scmp.ne.s32.totalorder %s59, %s60
      %p74 = scmp.eq.s32.totalorder %s26, 3
      %p75 = por %p73, %p74
      %p77 = scmp.ne.s32.totalorder %s60, %s76
      %p78 = scmp.eq.s32.totalorder %s26, 0
      %p79 = por %p77, %p78
      %s80 = ssub.s32 %s20, %s27
      %p81 = scmp.eq.s32.totalorder %s80, 0
      %s83 = sadd.s32 %s82, 1
      %s84 = scalar_select %p81, %s82, %s83
      %p87 = pneg %p81
      %p88 = scmp.eq.s32.totalorder %s20, 3
      %p89 = por %p87, %p88
      %p90 = scmp.ne.s32.totalorder %s82, %s85
      %p91 = scmp.eq.s32.totalorder %s20, 0
      %p92 = por %p90, %p91
      %p93 = scmp.ne.s32.totalorder %s82, %s85
      %p94 = scmp.eq.s32.totalorder %s25, 3
      %p95 = por %p93, %p94
      %p96 = scmp.ne.s32.totalorder %s85, %s86
      %p97 = scmp.eq.s32.totalorder %s25, 0
      %p98 = por %p96, %p97
      %p99 = scmp.ne.s32.totalorder %s85, %s86
      %p100 = scmp.eq.s32.totalorder %s26, 3
      %p101 = por %p99, %p100
      %p103 = scmp.ne.s32.totalorder %s86, %s102
      %p104 = scmp.eq.s32.totalorder %s26, 0
      %p105 = por %p103, %p104
      %s106 = ssub.s32 %s20, %s27
      %p107 = scmp.eq.s32.totalorder %s106, 0
      %s109 = sadd.s32 %s108, 1
      %s110 = scalar_select %p107, %s108, %s109
      %p113 = pneg %p107
      %p114 = scmp.eq.s32.totalorder %s20, 3
      %p115 = por %p113, %p114
      %p116 = scmp.ne.s32.totalorder %s108, %s111
      %p117 = scmp.eq.s32.totalorder %s20, 0
      %p118 = por %p116, %p117
      %p119 = scmp.ne.s32.totalorder %s108, %s111
      %p120 = scmp.eq.s32.totalorder %s25, 3
      %p121 = por %p119, %p120
      %p122 = scmp.ne.s32.totalorder %s111, %s112
      %p123 = scmp.eq.s32.totalorder %s25, 0
      %p124 = por %p122, %p123
      %p125 = scmp.ne.s32.totalorder %s111, %s112
      %p126 = scmp.eq.s32.totalorder %s26, 3
      %p127 = por %p125, %p126
      %p129 = scmp.ne.s32.totalorder %s112, %s128
      %p130 = scmp.eq.s32.totalorder %s26, 0
      %p131 = por %p129, %p130
      %s133 = sadd.s32 %s132, 1
      %p136 = scmp.eq.s32.totalorder %s20, 3
      %p137 = scmp.ne.s32.totalorder %s132, %s134
      %p138 = scmp.eq.s32.totalorder %s20, 0
      %p139 = por %p137, %p138
      %p140 = scmp.ne.s32.totalorder %s132, %s134
      %p141 = scmp.eq.s32.totalorder %s25, 3
      %p142 = por %p140, %p141
      %p143 = scmp.ne.s32.totalorder %s134, %s135
      %p144 = scmp.eq.s32.totalorder %s25, 0
      %p145 = por %p143, %p144
      %p146 = scmp.ne.s32.totalorder %s134, %s135
      %p147 = scmp.eq.s32.totalorder %s26, 3
      %p148 = por %p146, %p147
      %p150 = scmp.ne.s32.totalorder %s135, %s149
      %p151 = scmp.eq.s32.totalorder %s26, 0
      %p152 = por %p150, %p151
      %s153 = ssub.s32 %s20, %s27
      %p154 = scmp.eq.s32.totalorder %s153, 0
      %s156 = sadd.s32 %s155, 1
      %s157 = scalar_select %p154, %s155, %s156
      %p160 = pneg %p154
      %p161 = scmp.eq.s32.totalorder %s20, 3
      %p162 = por %p160, %p161
      %p163 = scmp.ne.s32.totalorder %s155, %s158
      %p164 = scmp.eq.s32.totalorder %s20, 0
      %p165 = por %p163, %p164
      %p166 = scmp.ne.s32.totalorder %s155, %s158
      %p167 = scmp.eq.s32.totalorder %s25, 3
      %p168 = por %p166, %p167
      %p169 = scmp.ne.s32.totalorder %s158, %s159
      %p170 = scmp.eq.s32.totalorder %s25, 0
      %p171 = por %p169, %p170
      %p172 = scmp.ne.s32.totalorder %s158, %s159
      %p173 = scmp.eq.s32.totalorder %s26, 3
      %p174 = por %p172, %p173
      %p176 = scmp.ne.s32.totalorder %s159, %s175
      %p177 = scmp.eq.s32.totalorder %s26, 0
      %p178 = por %p176, %p177
      %p179 = scmp.le.s32.totalorder 1, %s20
      %p180 = scmp.lt.s32.totalorder %s20, 5
      %p181 = pnand %p179, %p180
      %p182 = pneg %p181
      // Predicated region
      $region9: #{tpu_custom_call.1} parent=5 // pred_check
        _
      $region10: #{tpu_custom_call.1} parent=5 // pred_check_branch
        %184 = sbr.rel (%p181) target = $region12
      $region11: #{tpu_custom_call.1} parent=5 // pred_region
        %s185 = ssub.s32 %s20, 1
        // Predicated region
        $region13: #{tpu_custom_call.1} parent=11 // pred_check
          %p186 = pneg %p145
        $region14: #{tpu_custom_call.1} parent=11 // pred_check_branch
          %188 = sbr.rel (%p186) target = $region16
        $region15: #{tpu_custom_call.1} parent=11 // pred_region
          _
        $region16: #{tpu_custom_call.1} parent=11 // pred_fallthru
          _
      $region12: #{tpu_custom_call.1} parent=5 // pred_fallthru
        _
      %p189 = scmp.lt.s32.totalorder %s20, 4
      // Predicated region
      $region17: #{tpu_custom_call.1} parent=5 // pred_check
        %p190 = pneg %p189
      $region18: #{tpu_custom_call.1} parent=5 // pred_check_branch
        %192 = sbr.rel (%p190) target = $region20
      $region19: #{tpu_custom_call.1} parent=5 // pred_region
        // Predicated region
        $region21: #{tpu_custom_call.1} parent=19 // pred_check
          %p193 = pneg %p40
        $region22: #{tpu_custom_call.1} parent=19 // pred_check_branch
          %195 = sbr.rel (%p193) target = $region24
        $region23: #{tpu_custom_call.1} parent=19 // pred_region
          %s196 = sand.u32 %s30, 1
          %s197 = scalar_lea.sflag [#allocation3], %s196
          %s198 = sand.u32 %s30, 1
          %s199 = smul.addr %s198, 64
          %s200 = scalar_lea.vmem [#allocation2], %s199
          %202 = vsyncadd %s197, 0
          %s203 = smul.addr %s20, 8
          %s204 = smul.addr %s203, 8
          %s205 = scalar_lea.hbm %s0, %s204
          %s207 = sshll.u32 %s205, 4
          %s208 = int_to_ptr.hbm [resolvable:$true] %s207
          %s209 = sshll.u32 %s200, 4
          %s210 = int_to_ptr.vmem [resolvable:$true] %s209
          %212 = dma.hbm_to_vmem [thread:$0]  %s208, 1024, %s210, %s197
        $region24: #{tpu_custom_call.1} parent=19 // pred_fallthru
          _
        // Predicated region
        $region25: #{tpu_custom_call.1} parent=19 // pred_check
          %p213 = pneg %p66
        $region26: #{tpu_custom_call.1} parent=19 // pred_check_branch
          %215 = sbr.rel (%p213) target = $region28
        $region27: #{tpu_custom_call.1} parent=19 // pred_region
          %s216 = sand.u32 %s56, 1
          %s217 = scalar_lea.sflag [#allocation6], %s216
          %s218 = sand.u32 %s56, 1
          %s219 = smul.addr %s218, 64
          %s220 = scalar_lea.vmem [#allocation5], %s219
          %222 = vsyncadd %s217, 0
          %s223 = smul.addr %s20, 8
          %s224 = smul.addr %s223, 8
          %s225 = scalar_lea.hbm %s1, %s224
          %s227 = sshll.u32 %s225, 4
          %s228 = int_to_ptr.hbm [resolvable:$true] %s227
          %s229 = sshll.u32 %s220, 4
          %s230 = int_to_ptr.vmem [resolvable:$true] %s229
          %232 = dma.hbm_to_vmem [thread:$0]  %s228, 1024, %s230, %s217
        $region28: #{tpu_custom_call.1} parent=19 // pred_fallthru
          _
        // Predicated region
        $region29: #{tpu_custom_call.1} parent=19 // pred_check
          %p233 = pneg %p92
        $region30: #{tpu_custom_call.1} parent=19 // pred_check_branch
          %235 = sbr.rel (%p233) target = $region32
        $region31: #{tpu_custom_call.1} parent=19 // pred_region
          %p236 = scmp.lt.s32.totalorder %s20, 3
          %s237 = scalar_select %p236, %s20, 3
          %s238 = smul.addr %s237, 8
          %s239 = scalar_lea.vmem %s2, %s238
        $region32: #{tpu_custom_call.1} parent=19 // pred_fallthru
          _
        // Predicated region
        $region33: #{tpu_custom_call.1} parent=19 // pred_check
          %p240 = pneg %p118
        $region34: #{tpu_custom_call.1} parent=19 // pred_check_branch
          %242 = sbr.rel (%p240) target = $region36
        $region35: #{tpu_custom_call.1} parent=19 // pred_region
          %p243 = scmp.lt.s32.totalorder %s20, 3
          %s244 = scalar_select %p243, %s20, 3
          %s245 = smul.addr %s244, 8
          %s246 = scalar_lea.vmem %s3, %s245
        $region36: #{tpu_custom_call.1} parent=19 // pred_fallthru
          _
      $region20: #{tpu_custom_call.1} parent=5 // pred_fallthru
        _
      %p247 = scmp.le.s32.totalorder 1, %s20
      %p248 = scmp.lt.s32.totalorder %s20, 5
      %p249 = pnand %p247, %p248
      %p250 = pneg %p249
      // Predicated region
      $region37: #{tpu_custom_call.1} parent=5 // pred_check
        _
      $region38: #{tpu_custom_call.1} parent=5 // pred_check_branch
        %252 = sbr.rel (%p249) target = $region40
      $region39: #{tpu_custom_call.1} parent=5 // pred_region
        %s253 = ssub.s32 %s20, 1
        %s254 = sand.u32 %s33, 1
        %s255 = scalar_lea.sflag [#allocation3], %s254
        %s256 = sand.u32 %s33, 1
        %s257 = smul.addr %s256, 64
        %s258 = scalar_lea.vmem [#allocation2], %s257
        // Predicated region
        $region41: #{tpu_custom_call.1} parent=39 // pred_check
          %p259 = pneg %p46
        $region42: #{tpu_custom_call.1} parent=39 // pred_check_branch
          %261 = sbr.rel (%p259) target = $region44
        $region43: #{tpu_custom_call.1} parent=39 // pred_region
          %263 = dma.done %s255, 1024
        $region44: #{tpu_custom_call.1} parent=39 // pred_fallthru
          _
        %s264 = sand.u32 %s59, 1
        %s265 = scalar_lea.sflag [#allocation6], %s264
        %s266 = sand.u32 %s59, 1
        %s267 = smul.addr %s266, 64
        %s268 = scalar_lea.vmem [#allocation5], %s267
        // Predicated region
        $region45: #{tpu_custom_call.1} parent=39 // pred_check
          %p269 = pneg %p72
        $region46: #{tpu_custom_call.1} parent=39 // pred_check_branch
          %271 = sbr.rel (%p269) target = $region48
        $region47: #{tpu_custom_call.1} parent=39 // pred_region
          %273 = dma.done %s265, 1024
        $region48: #{tpu_custom_call.1} parent=39 // pred_fallthru
          _
        %s274 = sand.u32 %s33, 1
        %s275 = scalar_lea.sflag [#allocation3], %s274
        %s276 = sand.u32 %s33, 1
        %s277 = smul.addr %s276, 64
        %s278 = scalar_lea.vmem [#allocation2], %s277
        %p279 = pneg %p46
        %p280 = pneg %p43
        %s281 = sand.u32 %s59, 1
        %s282 = scalar_lea.sflag [#allocation6], %s281
        %s283 = sand.u32 %s59, 1
        %s284 = smul.addr %s283, 64
        %s285 = scalar_lea.vmem [#allocation5], %s284
        %p286 = pneg %p72
        %p287 = pneg %p69
        %p288 = scmp.lt.s32.totalorder %s25, 3
        %s289 = scalar_select %p288, %s25, 3
        %s290 = smul.addr %s289, 8
        %s291 = scalar_lea.vmem %s2, %s290
        %p292 = pneg %p98
        %p293 = pneg %p95
        %p294 = scmp.lt.s32.totalorder %s25, 3
        %s295 = scalar_select %p294, %s25, 3
        %s296 = smul.addr %s295, 8
        %s297 = scalar_lea.vmem %s3, %s296
        %p298 = pneg %p124
        %p299 = pneg %p121
        %p300 = pneg %p145
        %p301 = pneg %p142
        %p302 = pneg %p171
        %p303 = pneg %p168
        %s304 = sand.u32 %s158, 1
        %s305 = scalar_lea.sflag [#allocation4], %s304
        %s306 = sand.u32 %s158, 1
        %s307 = smul.addr %s306, 8
        %s308 = scalar_lea.vmem [#allocation7], %s307
        %p309 = scmp.lt.s32.totalorder %s25, 3
        %s310 = scalar_select %p309, %s25, 3
        %s311 = smul.addr %s310, 8
        %s312 = scalar_lea.vmem %s2, %s311
        %p313 = scmp.lt.s32.totalorder %s25, 3
        %s314 = scalar_select %p313, %s25, 3
        %s315 = smul.addr %s314, 8
        %s316 = scalar_lea.vmem %s3, %s315
        %v317 = vld [vmem:[%s258] sm:$0xff]
        %v318 = vld [vmem:[%s258 + $0x8] sm:$0xff]
        %v319 = vld [vmem:[%s258 + $0x10] sm:$0xff]
        %v320 = vld [vmem:[%s258 + $0x18] sm:$0xff]
        %v321 = vld [vmem:[%s258 + $0x20] sm:$0xff]
        %v322 = vld [vmem:[%s258 + $0x28] sm:$0xff]
        %v323 = vld [vmem:[%s258 + $0x30] sm:$0xff]
        %v324 = vld [vmem:[%s258 + $0x38] sm:$0xff]
        %v325 = vld [vmem:[%s268] sm:$0xff]
        %v326 = vld [vmem:[%s268 + $0x8] sm:$0xff]
        %v327 = vld [vmem:[%s268 + $0x10] sm:$0xff]
        %v328 = vld [vmem:[%s268 + $0x18] sm:$0xff]
        %v329 = vld [vmem:[%s268 + $0x20] sm:$0xff]
        %v330 = vld [vmem:[%s268 + $0x28] sm:$0xff]
        %v331 = vld [vmem:[%s268 + $0x30] sm:$0xff]
        %v332 = vld [vmem:[%s268 + $0x38] sm:$0xff]
        %v333 = vsub.f32 %v317, %v325
        %v334 = vsub.f32 %v318, %v326
        %v335 = vsub.f32 %v319, %v327
        %v336 = vsub.f32 %v320, %v328
        %v337 = vsub.f32 %v321, %v329
        %v338 = vsub.f32 %v322, %v330
        %v339 = vsub.f32 %v323, %v331
        %v340 = vsub.f32 %v324, %v332
        %v341 = vmul.f32 %v333, %v333
        %v342 = vmul.f32 %v334, %v334
        %v343 = vmul.f32 %v335, %v335
        %v344 = vmul.f32 %v336, %v336
        %v345 = vmul.f32 %v337, %v337
        %v346 = vmul.f32 %v338, %v338
        %v347 = vmul.f32 %v339, %v339
        %v348 = vmul.f32 %v340, %v340
        %v349 = vadd.f32 %v341, %v342
        %v350 = vadd.f32 %v349, %v343
        %v351 = vadd.f32 %v350, %v344
        %v352 = vadd.f32 %v351, %v345
        %v353 = vadd.f32 %v352, %v346
        %v354 = vadd.f32 %v353, %v347
        %v355 = vadd.f32 %v354, %v348
        %356 = vadd.xlane.f32.xlu0 %v355
        %v357 = vpop.xlane.xlu0 %356
        %v358 = vrot.slane %v357, 4
        %v359 = vadd.f32 %v357, %v358
        %v360 = vrot.slane %v359, 2
        %v361 = vadd.f32 %v359, %v360
        %v362 = vrot.slane %v361, 1
        %v363 = vadd.f32 %v361, %v362
        %s364 = vtos %v363
        %v365 = vld [vmem:[%s312] sm:$0xff]
        %v366 = vld [vmem:[%s316] sm:$0xff]
        %v367 = vld [vmem:[%s4] sm:$0xff]
        %v368 = vld [vmem:[%s4 + $0x8] sm:$0xff]
        %v369 = vld [vmem:[%s4 + $0x10] sm:$0xff]
        %v370 = vld [vmem:[%s4 + $0x18] sm:$0xff]
        %vm371 = vcmask 64512
        %v373 = vsel %vm371, %v366, 0
        %v376 = vsel %vm371, %v367, 0
        %v379 = vsel %vm371, %v368, 0
        %v382 = vsel %vm371, %v369, 0
        %v385 = vsel %vm371, %v370, 0
        %387 = vmatpush.xpose.msra.mxu0 0.0
        %388 = vmatpush.xpose.msra.mxu0 0.0
        %389 = vmatpush.xpose.msra.mxu0 0.0
        %390 = vmatpush.xpose.msra.mxu0 0.0
        %391 = vmatpush.xpose.msra.mxu0 0.0
        %392 = vmatpush.xpose.msra.mxu0 0.0
        %393 = vmatpush.xpose.msra.mxu0 0.0
        %394 = vmatpush.xpose.msra.mxu0 0.0
        %395 = vmatpush.xpose.msra.mxu0 0.0
        %396 = vmatpush.xpose.msra.mxu0 0.0
        %397 = vmatpush.xpose.msra.mxu0 0.0
        %398 = vmatpush.xpose.msra.mxu0 0.0
        %399 = vmatpush.xpose.msra.mxu0 %v385
        %400 = vmatpush.xpose.msra.mxu0 %v382
        %401 = vmatpush.xpose.msra.mxu0 %v379
        %402 = vmatpush.xpose.msra.mxu0 %v376
        %403 = vmatmul.f32.gmra.mxu0 %v373
        %v404 = vpop.f32.mrf.mxu0
        %v405 = vadd.f32 0.0, %v404
        %406 = vdwg.mxu0
        %v407 = vsub.f32 %v365, %v405
        %v408 = vmul.f32 %v407, %v407
        %vm409 = vcmask 261120
        %v410 = vsel %vm409, %v408, 0.0
        %411 = vadd.xlane.f32.xlu0 %v410
        %v412 = vpop.xlane.xlu0 %411
        %v413 = vrot.slane %v412, 4
        %v414 = vadd.f32 %v412, %v413
        %v415 = vrot.slane %v414, 2
        %v416 = vadd.f32 %v414, %v415
        %v417 = vrot.slane %v416, 1
        %v418 = vadd.f32 %v416, %v417
        %s419 = vtos %v418
        %s420 = smul.f32 %s419, 0.2
        %s421 = sadd.f32 %s364, %s420
        %s422 = smul.f32 %s421, 0.03125
        %423 = vxpose.xlu0.b32.start [1/16] %v367, 128
        %424 = vxpose.xlu0.b32.cont [2/16] %v368, 128
        %425 = vxpose.xlu0.b32.cont [3/16] %v369, 128
        %426 = vxpose.xlu0.b32.cont [4/16] %v370, 128
        %427 = vxpose.xlu0.b32.cont [5/16] 0.0, 128
        %428 = vxpose.xlu0.b32.cont [6/16] 0.0, 128
        %429 = vxpose.xlu0.b32.cont [7/16] 0.0, 128
        %430 = vxpose.xlu0.b32.cont [8/16] 0.0, 128
        %431 = vxpose.xlu0.b32.cont [9/16] 0.0, 128
        %432 = vxpose.xlu0.b32.cont [10/16] 0.0, 128
        %433 = vxpose.xlu0.b32.cont [11/16] 0.0, 128
        %434 = vxpose.xlu0.b32.cont [12/16] 0.0, 128
        %435 = vxpose.xlu0.b32.cont [13/16] 0.0, 128
        %436 = vxpose.xlu0.b32.cont [14/16] 0.0, 128
        %437 = vxpose.xlu0.b32.cont [15/16] 0.0, 128
        %438 = vxpose.xlu0.b32.end [16/16] 0.0, 128
        %v439 = vpop.trf.xlu0
        %v440 = vpop.trf.xlu0
        %v441 = vpop.trf.xlu0
        %v442 = vpop.trf.xlu0
        %v443 = vpop.trf.xlu0
        %v444 = vpop.trf.xlu0
        %v445 = vpop.trf.xlu0
        %v446 = vpop.trf.xlu0
        %v447 = vpop.trf.xlu0
        %v448 = vpop.trf.xlu0
        %v449 = vpop.trf.xlu0
        %v450 = vpop.trf.xlu0
        %v451 = vpop.trf.xlu0
        %v452 = vpop.trf.xlu0
        %v453 = vpop.trf.xlu0
        %v454 = vpop.trf.xlu0
        %v456 = vsel %vm409, %v439, 0
        %458 = vmatpush.msra.mxu0 0.0
        %459 = vmatpush.msra.mxu0 0.0
        %460 = vmatpush.msra.mxu0 0.0
        %461 = vmatpush.msra.mxu0 0.0
        %462 = vmatpush.msra.mxu0 0.0
        %463 = vmatpush.msra.mxu0 0.0
        %464 = vmatpush.msra.mxu0 0.0
        %465 = vmatpush.msra.mxu0 0.0
        %466 = vmatpush.msra.mxu0 0.0
        %467 = vmatpush.msra.mxu0 0.0
        %468 = vmatpush.msra.mxu0 0.0
        %469 = vmatpush.msra.mxu0 0.0
        %470 = vmatpush.msra.mxu0 %v370
        %471 = vmatpush.msra.mxu0 %v369
        %472 = vmatpush.msra.mxu0 %v368
        %473 = vmatpush.msra.mxu0 %v367
        %474 = vmatmul.f32.gmra.mxu0 %v456
        %v475 = vpop.f32.mrf.mxu0
        %v476 = vadd.f32 0.0, %v475
        %477 = vdwg.mxu0
        %v478 = vmul.f32 %v476, %v476
        %v479 = vsel %vm371, %v478, 0.0
        %480 = vadd.xlane.f32.xlu0 %v479
        %v481 = vpop.xlane.xlu0 %480
        %v482 = vrot.slane %v481, 4
        %v483 = vadd.f32 %v481, %v482
        %v484 = vrot.slane %v483, 2
        %v485 = vadd.f32 %v483, %v484
        %v486 = vrot.slane %v485, 1
        %v487 = vadd.f32 %v485, %v486
        %s488 = vtos %v487
        %v489 = vmul.f32 %v367, %v367
        %v490 = vmul.f32 %v368, %v368
        %v491 = vmul.f32 %v369, %v369
        %v492 = vmul.f32 %v370, %v370
        %v493 = vsel %vm371, %v489, 0.0
        %v494 = vsel %vm371, %v490, 0.0
        %v495 = vadd.f32 %v493, %v494
        %v496 = vsel %vm371, %v491, 0.0
        %v497 = vadd.f32 %v495, %v496
        %v498 = vsel %vm371, %v492, 0.0
        %v499 = vadd.f32 %v497, %v498
        %500 = vadd.xlane.f32.xlu0 %v499
        %v501 = vpop.xlane.xlu0 %500
        %v502 = vrot.slane %v501, 4
        %v503 = vadd.f32 %v501, %v502
        %v504 = vrot.slane %v503, 2
        %v505 = vadd.f32 %v503, %v504
        %v506 = vrot.slane %v505, 1
        %v507 = vadd.f32 %v505, %v506
        %s508 = vtos %v507
        %s509 = smul.f32 %s508, 2.0
        %s510 = ssub.f32 %s488, %s509
        %s511 = sadd.f32 %s510, 8.0
        %v512 = vrcp.pop 64.0
        %v513 = vmul.f32 64.0, %v512
        %v514 = vsub.f32 1.0, %v513
        %v515 = vmul.f32 %v512, %v514
        %v516 = vadd.f32 %v512, %v515
        %vm517 = vweird.f32 %v512
        %v518 = vsel %vm517, %v512, %v516
        %s519 = vtos %v518
        %s520 = smul.f32 %s511, %s519
        %p521 = scmp.eq.s32.totalorder %s25, 0
        %s522 = smul.f32 %s520, 0.1
        %s523 = scalar_select %p521, %s522, 0.0
        %s524 = sadd.f32 %s422, %s523
        %v525 = vlaneseq
        %v526 = vshrl.u32 %v525, 7
        %v527 = vlaneseq
        %v528 = vand.u32 %v527, 127
        %vm529 = vcmp.eq.s32.totalorder %v526, 0
        %vm530 = vcmp.eq.s32.totalorder %v528, 0
        %vm531 = vmand %vm529, %vm530
        %v532 = vstv %s524
        %v533 = vsel %vm531, %v532, 0.0
        %534 = vst [vmem:[%s308] sm:$0xff] %v533
        %s535 = sand.u32 %s158, 1
        %s536 = scalar_lea.sflag [#allocation4], %s535
        %s537 = sand.u32 %s158, 1
        %s538 = smul.addr %s537, 8
        %s539 = scalar_lea.vmem [#allocation7], %s538
        // Predicated region
        $region49: #{tpu_custom_call.1} parent=39 // pred_check
          %p540 = pneg %p168
        $region50: #{tpu_custom_call.1} parent=39 // pred_check_branch
          %542 = sbr.rel (%p540) target = $region52
        $region51: #{tpu_custom_call.1} parent=39 // pred_region
          %544 = vsyncadd %s536, 0
          %s545 = smul.addr %s25, 8
          %s546 = scalar_lea.hbm %s5, %s545
          %s548 = sshll.u32 %s539, 4
          %s549 = int_to_ptr.vmem [resolvable:$true] %s548
          %s550 = sshll.u32 %s546, 4
          %s551 = int_to_ptr.hbm [resolvable:$true] %s550
          %553 = dma.vmem_to_hbm [thread:$0]  %s549, 128, %s551, %s536
        $region52: #{tpu_custom_call.1} parent=39 // pred_fallthru
          _
      $region40: #{tpu_custom_call.1} parent=5 // pred_fallthru
        _
      %p554 = scmp.le.s32.totalorder 2, %s20
      // Predicated region
      $region53: #{tpu_custom_call.1} parent=5 // pred_check
        %p555 = pneg %p554
      $region54: #{tpu_custom_call.1} parent=5 // pred_check_branch
        %557 = sbr.rel (%p555) target = $region56
      $region55: #{tpu_custom_call.1} parent=5 // pred_region
        %s558 = ssub.s32 %s20, 2
        // Predicated region
        $region57: #{tpu_custom_call.1} parent=55 // pred_check
          %p559 = pneg %p174
        $region58: #{tpu_custom_call.1} parent=55 // pred_check_branch
          %561 = sbr.rel (%p559) target = $region60
        $region59: #{tpu_custom_call.1} parent=55 // pred_region
          %s562 = sand.u32 %s159, 1
          %s563 = scalar_lea.sflag [#allocation4], %s562
          %s564 = sand.u32 %s159, 1
          %s565 = smul.addr %s564, 8
          %s566 = scalar_lea.vmem [#allocation7], %s565
          %568 = dma.done %s563, 128
        $region60: #{tpu_custom_call.1} parent=55 // pred_fallthru
          _
      $region56: #{tpu_custom_call.1} parent=5 // pred_fallthru
        _
    $region6: #{tpu_custom_call.1} parent=1 // loop_footer
      %s24 = sadd.s32 1, %s20
    $region7: #{tpu_custom_call.1} parent=1 // loop_footer_branch
      %19 = sbr.rel target = $region3
    $region8: #{tpu_custom_call.1} parent=1 // loop_exit
      _
    %569 = vsyncpa [#allocation3], 1
    %s570 = scalar_lea.sflag [#allocation3], 1
    %571 = vsyncpa %s570, 1
    %572 = vsyncpa [#allocation6], 1
    %s573 = scalar_lea.sflag [#allocation6], 1
    %574 = vsyncpa %s573, 1
    %575 = vsyncpa [#allocation4], 1
    %s576 = scalar_lea.sflag [#allocation4], 1
    %577 = vsyncpa %s576, 1

</llo_original>
